<compile_context>
chip_gen: v7x
topology: tpu7x:2x2x1
jax: 0.10.0
libtpu: 0.0.40
codegen_flags: <defaults>
</compile_context>

<pallas_src>
import functools

import jax
import jax.numpy as jnp
from jax.experimental import pallas as pl
from jax.experimental.pallas import tpu as pltpu

WINDOW = 5
STRIDES = 1
EPS = 1e-6


def _window_positions(t_num, window, strides):
    """Static list of window start positions, exactly as in the PyTorch forward."""
    iter_list = list(range(0, t_num - window + 1, strides))
    if t_num - window not in iter_list:
        iter_list.append(t_num - window)
    return tuple(iter_list)


def _ts_kurt_kernel(x_ref, o_ref, *, positions, window, strides, eps):
    # x_ref: (T, tf) VMEM tile (batch dim squeezed), o_ref: (S, tf) VMEM tile.
    x = x_ref[...].astype(jnp.float32)
    t_num = x.shape[0]
    s_dense = t_num - window + 1          # stride-1 (dense) window count
    inv_w = 1.0 / window

    # ---- Pass 1: windowed mean.  Only one shifted slab live at a time. ----
    mean = x[0:s_dense, :]
    for w in range(1, window):
        mean = mean + x[w:w + s_dense, :]
    mean = mean * inv_w

    # ---- Pass 2: central 2nd / 4th moments over the window axis. ----
    acc2 = jnp.zeros_like(mean)
    acc4 = jnp.zeros_like(mean)
    for w in range(window):
        d = x[w:w + s_dense, :] - mean
        d2 = d * d
        acc2 = acc2 + d2
        acc4 = acc4 + d2 * d2

    m4 = acc4 * inv_w
    m2 = acc2 * inv_w + eps
    den = m2 * m2

    # EUP approximate reciprocal + 2 Newton steps (keeps f32-level accuracy
    # while moving the divide off the VALU; den >= eps^2 > 0 so it is safe).
    r = pl.reciprocal(den, approx=True)
    r = r * (2.0 - den * r)
    r = r * (2.0 - den * r)
    kurt = m4 * r

    # NOTE: the PyTorch NaN patch replaces NaN rows with (mean - mean); since
    # eps > 0 the denominator never vanishes, NaN can only come from NaN
    # inputs, for which (mean - mean) is NaN as well — behaviour matches.

    # ---- Subsample dense result to the requested window positions. ----
    base = tuple(range(0, s_dense, strides))
    if positions == base:
        out = kurt if strides == 1 else kurt[::strides, :]
    else:
        # PyTorch appends the tail window (start = T - window) when it is not
        # on the stride grid.
        out = jnp.concatenate(
            [kurt[::strides, :], kurt[s_dense - 1:s_dense, :]], axis=0)

    o_ref[...] = out.astype(o_ref.dtype)


def _pick_feature_tile(f_num):
    """Lane tile over features: multiple of 128 that divides F, else full F."""
    if f_num % 128 == 0:
        tf = 128
        while tf * 2 <= 512 and f_num % (tf * 2) == 0:
            tf *= 2
        return tf
    return f_num


def ts_kurt(x, window=WINDOW, strides=STRIDES, eps=EPS):
    """Pallas equivalent of ts_kurt.forward.  x: (B, T, F) float32 -> (B, F, S)."""
    b, t_num, f_num = x.shape
    positions = _window_positions(t_num, window, strides)
    s_num = len(positions)

    tf = _pick_feature_tile(f_num)
    n_f = f_num // tf

    kernel = functools.partial(
        _ts_kurt_kernel, positions=positions, window=window,
        strides=strides, eps=eps)

    # Advisory cost estimate so XLA schedules sensibly around the custom call.
    flops = int(b * s_num * f_num * (6 * window + 10))
    bytes_accessed = int(4 * b * f_num * (t_num + s_num))
    cost = pl.CostEstimate(flops=flops,
                           transcendentals=int(b * s_num * f_num),
                           bytes_accessed=bytes_accessed)

    out_bsf = pl.pallas_call(
        kernel,
        grid=(b, n_f),
        in_specs=[pl.BlockSpec((None, t_num, tf), lambda i, j: (i, 0, j))],
        out_specs=pl.BlockSpec((None, s_num, tf), lambda i, j: (i, 0, j)),
        out_shape=jax.ShapeDtypeStruct((b, s_num, f_num), x.dtype),
        compiler_params=pltpu.CompilerParams(
            dimension_semantics=("parallel", "parallel"),
            vmem_limit_bytes=64 * 1024 * 1024,
        ),
        cost_estimate=cost,
    )(x)

    # Same as PyTorch's reshape(-1, s_num, f_num).transpose(1, 2) -> (B, F, S).
    return jnp.transpose(out_bsf, (0, 2, 1))


def ts_kurt_ref(x, window=WINDOW, strides=STRIDES, eps=EPS):
    """Pure-JAX reference mirroring the PyTorch loop."""
    _, t_num, _ = x.shape
    positions = _window_positions(t_num, window, strides)
    outs = []
    for p in positions:
        win = x[:, p:p + window, :]                       # (B, W, F)
        m = jnp.mean(win, axis=1, keepdims=True)
        d = win - m
        m4 = jnp.mean(d ** 4, axis=1)
        m2 = jnp.mean(d ** 2, axis=1) + eps
        outs.append(m4 / (m2 ** 2))                       # (B, F)
    return jnp.stack(outs, axis=2)                        # (B, F, S)


if __name__ == "__main__":
    key = jax.random.PRNGKey(0)

    # Small shape matching the module's convention (F < 128 -> full-F tile).
    B, T, F = 2, 16, 8                                    # S = T - WINDOW + 1 = 12
    x = jax.random.normal(key, (B, T, F), dtype=jnp.float32)
    out = ts_kurt(x)
    jax.block_until_ready(out)
    ref = ts_kurt_ref(x)
    assert out.shape == (B, F, T - WINDOW + 1), out.shape
    assert jnp.allclose(out, ref, atol=1e-5, rtol=1e-5), \
        float(jnp.max(jnp.abs(out - ref)))

    # Slightly larger shape that exercises the tiled-feature grid (F = 3 * 128).
    B2, T2, F2 = 2, 32, 384
    x2 = jax.random.normal(jax.random.PRNGKey(1), (B2, T2, F2), dtype=jnp.float32)
    out2 = ts_kurt(x2)
    jax.block_until_ready(out2)
    ref2 = ts_kurt_ref(x2)
    assert out2.shape == (B2, F2, T2 - WINDOW + 1), out2.shape
    assert jnp.allclose(out2, ref2, atol=1e-5, rtol=1e-5), \
        float(jnp.max(jnp.abs(out2 - ref2)))

    print("KERNEL_OK")
</pallas_src>

<mosaic_0001>
module attributes {stable_mosaic.version = 11 : i64} {
  func.func @_ts_kurt_kernel(%arg0: i32, %arg1: i32, %arg2: memref<1x16x8xf32, #tpu.memory_space<vmem>>, %arg3: memref<1x12x8xf32, #tpu.memory_space<vmem>>) attributes {dimension_semantics = [#tpu.dimension_semantics<parallel>, #tpu.dimension_semantics<parallel>], iteration_bounds = array<i64: 2, 1>, scalar_prefetch = 0 : i64, scratch_operands = 0 : i64, tpu.core_type = #tpu.core_type<tc>, window_params = [{transform_indices = @transform_0, window_bounds = array<i64: 1, 16, 8>}, {transform_indices = @transform_1, window_bounds = array<i64: 1, 12, 8>}]} {
    %c0 = arith.constant 0 : index
    %c0_0 = arith.constant 0 : index
    %c0_1 = arith.constant 0 : index
    %0 = vector.load %arg2[%c0, %c0_0, %c0_1] : memref<1x16x8xf32, #tpu.memory_space<vmem>>, vector<1x16x8xf32>
    %1 = vector.shape_cast %0 : vector<1x16x8xf32> to vector<16x8xf32>
    %2 = vector.extract_strided_slice %1 {offsets = [0, 0], sizes = [12, 8], strides = [1, 1]} : vector<16x8xf32> to vector<12x8xf32>
    %3 = vector.extract_strided_slice %1 {offsets = [1, 0], sizes = [12, 8], strides = [1, 1]} : vector<16x8xf32> to vector<12x8xf32>
    %4 = arith.addf %2, %3 : vector<12x8xf32>
    %5 = vector.extract_strided_slice %1 {offsets = [2, 0], sizes = [12, 8], strides = [1, 1]} : vector<16x8xf32> to vector<12x8xf32>
    %6 = arith.addf %4, %5 : vector<12x8xf32>
    %7 = vector.extract_strided_slice %1 {offsets = [3, 0], sizes = [12, 8], strides = [1, 1]} : vector<16x8xf32> to vector<12x8xf32>
    %8 = arith.addf %6, %7 : vector<12x8xf32>
    %9 = vector.extract_strided_slice %1 {offsets = [4, 0], sizes = [12, 8], strides = [1, 1]} : vector<16x8xf32> to vector<12x8xf32>
    %10 = arith.addf %8, %9 : vector<12x8xf32>
    %cst = arith.constant 2.000000e-01 : f32
    %11 = vector.broadcast %cst : f32 to vector<12x8xf32>
    %12 = arith.mulf %10, %11 : vector<12x8xf32>
    %cst_2 = arith.constant 0.000000e+00 : f32
    %13 = vector.broadcast %cst_2 : f32 to vector<12x8xf32>
    %cst_3 = arith.constant 0.000000e+00 : f32
    %14 = vector.broadcast %cst_3 : f32 to vector<12x8xf32>
    %15 = vector.extract_strided_slice %1 {offsets = [0, 0], sizes = [12, 8], strides = [1, 1]} : vector<16x8xf32> to vector<12x8xf32>
    %16 = arith.subf %15, %12 : vector<12x8xf32>
    %17 = arith.mulf %16, %16 : vector<12x8xf32>
    %18 = arith.addf %13, %17 : vector<12x8xf32>
    %19 = arith.mulf %17, %17 : vector<12x8xf32>
    %20 = arith.addf %14, %19 : vector<12x8xf32>
    %21 = vector.extract_strided_slice %1 {offsets = [1, 0], sizes = [12, 8], strides = [1, 1]} : vector<16x8xf32> to vector<12x8xf32>
    %22 = arith.subf %21, %12 : vector<12x8xf32>
    %23 = arith.mulf %22, %22 : vector<12x8xf32>
    %24 = arith.addf %18, %23 : vector<12x8xf32>
    %25 = arith.mulf %23, %23 : vector<12x8xf32>
    %26 = arith.addf %20, %25 : vector<12x8xf32>
    %27 = vector.extract_strided_slice %1 {offsets = [2, 0], sizes = [12, 8], strides = [1, 1]} : vector<16x8xf32> to vector<12x8xf32>
    %28 = arith.subf %27, %12 : vector<12x8xf32>
    %29 = arith.mulf %28, %28 : vector<12x8xf32>
    %30 = arith.addf %24, %29 : vector<12x8xf32>
    %31 = arith.mulf %29, %29 : vector<12x8xf32>
    %32 = arith.addf %26, %31 : vector<12x8xf32>
    %33 = vector.extract_strided_slice %1 {offsets = [3, 0], sizes = [12, 8], strides = [1, 1]} : vector<16x8xf32> to vector<12x8xf32>
    %34 = arith.subf %33, %12 : vector<12x8xf32>
    %35 = arith.mulf %34, %34 : vector<12x8xf32>
    %36 = arith.addf %30, %35 : vector<12x8xf32>
    %37 = arith.mulf %35, %35 : vector<12x8xf32>
    %38 = arith.addf %32, %37 : vector<12x8xf32>
    %39 = vector.extract_strided_slice %1 {offsets = [4, 0], sizes = [12, 8], strides = [1, 1]} : vector<16x8xf32> to vector<12x8xf32>
    %40 = arith.subf %39, %12 : vector<12x8xf32>
    %41 = arith.mulf %40, %40 : vector<12x8xf32>
    %42 = arith.addf %36, %41 : vector<12x8xf32>
    %43 = arith.mulf %41, %41 : vector<12x8xf32>
    %44 = arith.addf %38, %43 : vector<12x8xf32>
    %cst_4 = arith.constant 2.000000e-01 : f32
    %45 = vector.broadcast %cst_4 : f32 to vector<12x8xf32>
    %46 = arith.mulf %44, %45 : vector<12x8xf32>
    %cst_5 = arith.constant 2.000000e-01 : f32
    %47 = vector.broadcast %cst_5 : f32 to vector<12x8xf32>
    %48 = arith.mulf %42, %47 : vector<12x8xf32>
    %cst_6 = arith.constant 9.99999997E-7 : f32
    %49 = vector.broadcast %cst_6 : f32 to vector<12x8xf32>
    %50 = arith.addf %48, %49 : vector<12x8xf32>
    %51 = arith.mulf %50, %50 : vector<12x8xf32>
    %52 = tpu.reciprocal %51 {approx = true} : vector<12x8xf32> -> vector<12x8xf32>
    %53 = arith.mulf %51, %52 : vector<12x8xf32>
    %cst_7 = arith.constant 2.000000e+00 : f32
    %54 = vector.broadcast %cst_7 : f32 to vector<12x8xf32>
    %55 = arith.subf %54, %53 : vector<12x8xf32>
    %56 = arith.mulf %52, %55 : vector<12x8xf32>
    %57 = arith.mulf %51, %56 : vector<12x8xf32>
    %cst_8 = arith.constant 2.000000e+00 : f32
    %58 = vector.broadcast %cst_8 : f32 to vector<12x8xf32>
    %59 = arith.subf %58, %57 : vector<12x8xf32>
    %60 = arith.mulf %56, %59 : vector<12x8xf32>
    %61 = arith.mulf %46, %60 : vector<12x8xf32>
    %c0_9 = arith.constant 0 : index
    %c0_10 = arith.constant 0 : index
    %c0_11 = arith.constant 0 : index
    %62 = vector.load %arg3[%c0_9, %c0_10, %c0_11] : memref<1x12x8xf32, #tpu.memory_space<vmem>>, vector<1x12x8xf32>
    %63 = vector.shape_cast %62 : vector<1x12x8xf32> to vector<12x8xf32>
    %64 = vector.shape_cast %61 : vector<12x8xf32> to vector<1x12x8xf32>
    tpu.vector_store %arg3[%c0_9, %c0_10, %c0_11], %64 {strides = array<i32>} : memref<1x12x8xf32, #tpu.memory_space<vmem>>, vector<1x12x8xf32>,
    return
  }
  func.func @transform_0(%arg0: i32, %arg1: i32) -> (i32, i32, i32) {
    %c0_i32 = arith.constant 0 : i32
    %c0_i32_0 = arith.constant 0 : i32
    return %arg0, %c0_i32, %arg1 : i32, i32, i32
  }
  func.func @transform_1(%arg0: i32, %arg1: i32) -> (i32, i32, i32) {
    %c0_i32 = arith.constant 0 : i32
    %c0_i32_0 = arith.constant 0 : i32
    return %arg0, %c0_i32, %arg1 : i32, i32, i32
  }
}

</mosaic_0001>

<llo_original>
// kernel: tpu_custom_call.1
$region0: #{tpu_custom_call.1}
  #allocation0 [shape = 'u32[]', space=smem, size = 0x4, offset = 0x4, fixed_abs, tag = 'smem constant byte address 0x4 - core index']
  #allocation1 [shape = 'u32[144,128]{1,0:T(1,128)}', space=vmem, size = 0x12000, scoped, tag = 'internal scratch']
  %s0 = inlined_call_operand.hbm [shape: f32[2,16,8], index: 0, kind: input, shape index: {}]
  %s1 = inlined_call_operand.hbm [shape: f32[2,12,8], index: 1, kind: output, shape index: {}]
  %s2 = sld [smem:[#allocation0]]
  $region41: #{tpu_custom_call.1} parent=0
    _
  %s4 = ssub.s32 1, %s2
  %s5 = scalar_select 0, %s4, %s2
  $region1: #{tpu_custom_call.1} parent=0
    #allocation2 [shape = 'u8[16384]{0}', space=vmem, size = 0x4000, scoped, tag = 'input window, operand 0']
    #allocation3 [shape = 's32[2]{0}', space=sflag, size = 0x8, scoped, tag = 'scoped memory for tpu_custom_call.1']
    #allocation4 [shape = 's32[2]{0}', space=sflag, size = 0x8, scoped, tag = 'scoped memory for tpu_custom_call.1']
    #allocation5 [shape = 'u8[16384]{0}', space=vmem, size = 0x4000, scoped, tag = 'output window, operand 0']
    %6 = vsyncpa [#allocation3], 0
    %s7 = scalar_lea.sflag [#allocation3], 1
    %8 = vsyncpa %s7, 0
    %9 = vsyncpa [#allocation4], 0
    %s10 = scalar_lea.sflag [#allocation4], 1
    %11 = vsyncpa %s10, 0
    loop: start=0, step=1, limit=4
    $region2: #{tpu_custom_call.1} parent=1 // loop_pre_header
      _
    $region3: #{tpu_custom_call.1} parent=1 // loop_header
      %s13 = sphi 0, %s17
      %p14 = scmp.ge.s32.totalorder %s13, 4
      %s20 = sphi 0, %s32
      %s21 = sphi 0, %s28
      %s22 = sphi 0, %s20
      %s23 = sphi 0, %s21
      %s24 = sphi 0, %s22
      %s25 = sphi 0, %s23
      %s37 = sphi 0, %s39
      %s40 = sphi 0, %s37
      %s41 = sphi 0, %s40
      %s57 = sphi 0, %s41
      %s65 = sphi 0, %s67
      %s68 = sphi 0, %s65
      %s69 = sphi 0, %s68
      %s85 = sphi 0, %s69
    $region4: #{tpu_custom_call.1} parent=1 // loop_header_branch
      %16 = sbr.rel (%p14) target = $region8
    $region5: #{tpu_custom_call.1} parent=1 // loop_body
      %s18 = ssub.s32 %s13, 1
      %s19 = ssub.s32 %s13, 2
      %s26 = sadd.s32 1, %s21
      %p27 = scmp.ge.s32.totalorder %s26, 1
      %s28 = scalar_select %p27, 0, %s26
      %s29 = sadd.s32 1, %s20
      %s30 = scalar_select %p27, %s29, %s20
      %p31 = scmp.ge.s32.totalorder %s30, 2
      %s32 = scalar_select %p31, 0, %s30
      %s33 = ssub.s32 %s20, %s32
      %s34 = ssub.s32 %s21, %s28
      %s35 = sor.u32 %s33, %s34
      %p36 = scmp.eq.s32.totalorder %s35, 0
      %s38 = sadd.s32 %s37, 1
      %s39 = scalar_select %p36, %s37, %s38
      %p42 = pneg %p36
      %p43 = scmp.eq.s32.totalorder %s13, 1
      %p44 = por %p42, %p43
      %p45 = scmp.ne.s32.totalorder %s37, %s40
      %p46 = scmp.eq.s32.totalorder %s13, 0
      %p47 = por %p45, %p46
      %p48 = scmp.ne.s32.totalorder %s37, %s40
      %p49 = scmp.eq.s32.totalorder %s18, 1
      %p50 = por %p48, %p49
      %p51 = scmp.ne.s32.totalorder %s40, %s41
      %p52 = scmp.eq.s32.totalorder %s18, 0
      %p53 = por %p51, %p52
      %p54 = scmp.ne.s32.totalorder %s40, %s41
      %p55 = scmp.eq.s32.totalorder %s19, 1
      %p56 = por %p54, %p55
      %p58 = scmp.ne.s32.totalorder %s41, %s57
      %p59 = scmp.eq.s32.totalorder %s19, 0
      %p60 = por %p58, %p59
      %s61 = ssub.s32 %s20, %s32
      %s62 = ssub.s32 %s21, %s28
      %s63 = sor.u32 %s61, %s62
      %p64 = scmp.eq.s32.totalorder %s63, 0
      %s66 = sadd.s32 %s65, 1
      %s67 = scalar_select %p64, %s65, %s66
      %p70 = pneg %p64
      %p71 = scmp.eq.s32.totalorder %s13, 1
      %p72 = por %p70, %p71
      %p73 = scmp.ne.s32.totalorder %s65, %s68
      %p74 = scmp.eq.s32.totalorder %s13, 0
      %p75 = por %p73, %p74
      %p76 = scmp.ne.s32.totalorder %s65, %s68
      %p77 = scmp.eq.s32.totalorder %s18, 1
      %p78 = por %p76, %p77
      %p79 = scmp.ne.s32.totalorder %s68, %s69
      %p80 = scmp.eq.s32.totalorder %s18, 0
      %p81 = por %p79, %p80
      %p82 = scmp.ne.s32.totalorder %s68, %s69
      %p83 = scmp.eq.s32.totalorder %s19, 1
      %p84 = por %p82, %p83
      %p86 = scmp.ne.s32.totalorder %s69, %s85
      %p87 = scmp.eq.s32.totalorder %s19, 0
      %p88 = por %p86, %p87
      %p89 = scmp.le.s32.totalorder 1, %s13
      %p90 = scmp.lt.s32.totalorder %s13, 3
      %p91 = pnand %p89, %p90
      %p92 = pneg %p91
      // Predicated region
      $region9: #{tpu_custom_call.1} parent=5 // pred_check
        _
      $region10: #{tpu_custom_call.1} parent=5 // pred_check_branch
        %94 = sbr.rel (%p91) target = $region12
      $region11: #{tpu_custom_call.1} parent=5 // pred_region
        %s95 = ssub.s32 %s13, 1
      $region12: #{tpu_custom_call.1} parent=5 // pred_fallthru
        _
      %p96 = scmp.lt.s32.totalorder %s13, 2
      // Predicated region
      $region13: #{tpu_custom_call.1} parent=5 // pred_check
        %p97 = pneg %p96
      $region14: #{tpu_custom_call.1} parent=5 // pred_check_branch
        %99 = sbr.rel (%p97) target = $region16
      $region15: #{tpu_custom_call.1} parent=5 // pred_region
        // Predicated region
        $region17: #{tpu_custom_call.1} parent=15 // pred_check
          %p100 = pneg %p47
        $region18: #{tpu_custom_call.1} parent=15 // pred_check_branch
          %102 = sbr.rel (%p100) target = $region20
        $region19: #{tpu_custom_call.1} parent=15 // pred_region
          %s103 = sand.u32 %s37, 1
          %s104 = scalar_lea.sflag [#allocation3], %s103
          %s105 = sand.u32 %s37, 1
          %s106 = smul.addr %s105, 16
          %s107 = scalar_lea.vmem [#allocation2], %s106
          %s109 = ssub.s32 256, 256
          %110 = vsyncadd %s104, %s109
          %s111 = smul.addr %s20, 2
          %s112 = sadd.s32 %s21, %s111
          %s113 = smul.addr %s112, 128
          %s114 = scalar_lea.hbm %s0, %s113
          %s115 = sshll.u32 %s107, 4
          %s116 = int_to_ptr.vmem [resolvable:$true] %s115
          %121 = dma.hbm_to_vmem [thread:$0]  %s114, 256, %s116, %s104, 128, 128, 8
        $region20: #{tpu_custom_call.1} parent=15 // pred_fallthru
          _
      $region16: #{tpu_custom_call.1} parent=5 // pred_fallthru
        _
      %p122 = scmp.le.s32.totalorder 1, %s13
      %p123 = scmp.lt.s32.totalorder %s13, 3
      %p124 = pnand %p122, %p123
      %p125 = pneg %p124
      // Predicated region
      $region21: #{tpu_custom_call.1} parent=5 // pred_check
        _
      $region22: #{tpu_custom_call.1} parent=5 // pred_check_branch
        %127 = sbr.rel (%p124) target = $region24
      $region23: #{tpu_custom_call.1} parent=5 // pred_region
        %s128 = ssub.s32 %s13, 1
        %s129 = sand.u32 %s40, 1
        %s130 = scalar_lea.sflag [#allocation3], %s129
        %s131 = sand.u32 %s40, 1
        %s132 = smul.addr %s131, 16
        %s133 = scalar_lea.vmem [#allocation2], %s132
        // Predicated region
        $region25: #{tpu_custom_call.1} parent=23 // pred_check
          %p134 = pneg %p53
        $region26: #{tpu_custom_call.1} parent=23 // pred_check_branch
          %136 = sbr.rel (%p134) target = $region28
        $region27: #{tpu_custom_call.1} parent=23 // pred_region
          %137 = dma.done %s130, 256
        $region28: #{tpu_custom_call.1} parent=23 // pred_fallthru
          _
        %s138 = sand.u32 %s40, 1
        %s139 = scalar_lea.sflag [#allocation3], %s138
        %s140 = sand.u32 %s40, 1
        %s141 = smul.addr %s140, 16
        %s142 = scalar_lea.vmem [#allocation2], %s141
        %p143 = pneg %p53
        %p144 = pneg %p50
        %p145 = pneg %p81
        %p146 = pneg %p78
        %s147 = sand.u32 %s68, 1
        %s148 = scalar_lea.sflag [#allocation4], %s147
        %s149 = sand.u32 %s68, 1
        %s150 = smul.addr %s149, 16
        %s151 = scalar_lea.vmem [#allocation5], %s150
        %v152 = vld [vmem:[%s133] sm:$0xff]
        %v153 = vld [vmem:[%s133 + $0x8] sm:$0xff]
        %vm156 = vcmask 1046528
        %v157 = vrot.slane %v152, 1
        %v158 = vrot.slane %v153, 1
        %v159 = vsel %vm156, %v157, %v158
        %v162 = vadd.f32 %v152, %v159
        %v163 = vadd.f32 %v153, %v158
        %vm164 = vcmask 1045504
        %v165 = vrot.slane %v152, 2
        %v166 = vrot.slane %v153, 2
        %v167 = vsel %vm164, %v165, %v166
        %v170 = vadd.f32 %v162, %v167
        %v171 = vadd.f32 %v163, %v166
        %vm172 = vcmask 1044480
        %v173 = vrot.slane %v152, 3
        %v174 = vrot.slane %v153, 3
        %v175 = vsel %vm172, %v173, %v174
        %v178 = vadd.f32 %v170, %v175
        %v179 = vadd.f32 %v171, %v174
        %vm180 = vcmask 1043456
        %v181 = vrot.slane %v152, 4
        %v182 = vrot.slane %v153, 4
        %v183 = vsel %vm180, %v181, %v182
        %v186 = vadd.f32 %v178, %v183
        %v187 = vadd.f32 %v179, %v182
        %v188 = vmul.f32 %v186, 0.2
        %v189 = vmul.f32 %v187, 0.2
        %v190 = vsub.f32 %v152, %v188
        %v191 = vsub.f32 %v153, %v189
        %v192 = vmul.f32 %v190, %v190
        %v193 = vmul.f32 %v191, %v191
        %v194 = vadd.f32 %v192, 0.0
        %v195 = vadd.f32 %v193, 0.0
        %v196 = vmul.f32 %v192, %v192
        %v197 = vmul.f32 %v193, %v193
        %v198 = vadd.f32 %v196, 0.0
        %v199 = vadd.f32 %v197, 0.0
        %vm202 = vcmask 1040384
        %v203 = vrot.slane %v188, 7
        %v204 = vrot.slane %v189, 7
        %v205 = vsel %vm202, %v203, %v204
        %v208 = vsub.f32 %v152, %v203
        %v209 = vsub.f32 %v153, %v205
        %v210 = vmul.f32 %v208, %v208
        %v211 = vmul.f32 %v209, %v209
        %v214 = vrot.slane %v210, 1
        %v215 = vrot.slane %v211, 1
        %v216 = vsel %vm156, %v214, %v215
        %v219 = vadd.f32 %v194, %v216
        %v220 = vadd.f32 %v195, %v215
        %v221 = vmul.f32 %v210, %v210
        %v222 = vmul.f32 %v211, %v211
        %v225 = vrot.slane %v221, 1
        %v226 = vrot.slane %v222, 1
        %v227 = vsel %vm156, %v225, %v226
        %v230 = vadd.f32 %v198, %v227
        %v231 = vadd.f32 %v199, %v226
        %vm232 = vcmask 1041408
        %v233 = vrot.slane %v188, 6
        %v234 = vrot.slane %v189, 6
        %v235 = vsel %vm232, %v233, %v234
        %v238 = vsub.f32 %v152, %v233
        %v239 = vsub.f32 %v153, %v235
        %v240 = vmul.f32 %v238, %v238
        %v241 = vmul.f32 %v239, %v239
        %v244 = vrot.slane %v240, 2
        %v245 = vrot.slane %v241, 2
        %v246 = vsel %vm164, %v244, %v245
        %v249 = vadd.f32 %v219, %v246
        %v250 = vadd.f32 %v220, %v245
        %v251 = vmul.f32 %v240, %v240
        %v252 = vmul.f32 %v241, %v241
        %v255 = vrot.slane %v251, 2
        %v256 = vrot.slane %v252, 2
        %v257 = vsel %vm164, %v255, %v256
        %v260 = vadd.f32 %v230, %v257
        %v261 = vadd.f32 %v231, %v256
        %vm262 = vcmask 1042432
        %v263 = vrot.slane %v188, 5
        %v264 = vrot.slane %v189, 5
        %v265 = vsel %vm262, %v263, %v264
        %v268 = vsub.f32 %v152, %v263
        %v269 = vsub.f32 %v153, %v265
        %v270 = vmul.f32 %v268, %v268
        %v271 = vmul.f32 %v269, %v269
        %v274 = vrot.slane %v270, 3
        %v275 = vrot.slane %v271, 3
        %v276 = vsel %vm172, %v274, %v275
        %v279 = vadd.f32 %v249, %v276
        %v280 = vadd.f32 %v250, %v275
        %v281 = vmul.f32 %v270, %v270
        %v282 = vmul.f32 %v271, %v271
        %v285 = vrot.slane %v281, 3
        %v286 = vrot.slane %v282, 3
        %v287 = vsel %vm172, %v285, %v286
        %v290 = vadd.f32 %v260, %v287
        %v291 = vadd.f32 %v261, %v286
        %v292 = vrot.slane %v188, 4
        %v293 = vrot.slane %v189, 4
        %v294 = vsel %vm180, %v292, %v293
        %v297 = vsub.f32 %v152, %v292
        %v298 = vsub.f32 %v153, %v294
        %v299 = vmul.f32 %v297, %v297
        %v300 = vmul.f32 %v298, %v298
        %v303 = vrot.slane %v299, 4
        %v304 = vrot.slane %v300, 4
        %v305 = vsel %vm180, %v303, %v304
        %v308 = vadd.f32 %v279, %v305
        %v309 = vadd.f32 %v280, %v304
        %v310 = vmul.f32 %v299, %v299
        %v311 = vmul.f32 %v300, %v300
        %v314 = vrot.slane %v310, 4
        %v315 = vrot.slane %v311, 4
        %v316 = vsel %vm180, %v314, %v315
        %v319 = vadd.f32 %v290, %v316
        %v320 = vadd.f32 %v291, %v315
        %v321 = vmul.f32 %v319, 0.2
        %v322 = vmul.f32 %v320, 0.2
        %v323 = vmul.f32 %v308, 0.2
        %v324 = vmul.f32 %v309, 0.2
        %v325 = vadd.f32 %v323, 1e-06
        %v326 = vadd.f32 %v324, 1e-06
        %v327 = vmul.f32 %v325, %v325
        %v328 = vmul.f32 %v326, %v326
        %v329 = vrcp.pop %v327
        %v330 = vrcp.pop %v328
        %v331 = vmul.f32 %v327, %v329
        %v332 = vmul.f32 %v328, %v330
        %v333 = vsub.f32 2.0, %v331
        %v334 = vsub.f32 2.0, %v332
        %v335 = vmul.f32 %v329, %v333
        %v336 = vmul.f32 %v330, %v334
        %v337 = vmul.f32 %v327, %v335
        %v338 = vmul.f32 %v328, %v336
        %v339 = vsub.f32 2.0, %v337
        %v340 = vsub.f32 2.0, %v338
        %v341 = vmul.f32 %v335, %v339
        %v342 = vmul.f32 %v336, %v340
        %v343 = vmul.f32 %v321, %v341
        %v344 = vmul.f32 %v322, %v342
        %vm345 = vcmask 64512
        %346 = vst.msk [vmem:[%s151] sm:$0xff] %vm345, %v343
        %vm347 = vcmask 60416
        %348 = vst.msk [vmem:[%s151 + $0x8] sm:$0xf] %vm347, %v344
        %s349 = sand.u32 %s68, 1
        %s350 = scalar_lea.sflag [#allocation4], %s349
        %s351 = sand.u32 %s68, 1
        %s352 = smul.addr %s351, 16
        %s353 = scalar_lea.vmem [#allocation5], %s352
        // Predicated region
        $region29: #{tpu_custom_call.1} parent=23 // pred_check
          %p354 = pneg %p78
        $region30: #{tpu_custom_call.1} parent=23 // pred_check_branch
          %356 = sbr.rel (%p354) target = $region32
        $region31: #{tpu_custom_call.1} parent=23 // pred_region
          %s358 = ssub.s32 256, 256
          %359 = vsyncadd %s350, %s358
          %s360 = smul.addr %s22, 2
          %s361 = sadd.s32 %s23, %s360
          %s362 = smul.addr %s361, 128
          %s363 = scalar_lea.hbm %s1, %s362
          %s364 = sshll.u32 %s353, 4
          %s365 = int_to_ptr.vmem [resolvable:$true] %s364
          %370 = dma.vmem_to_hbm [thread:$0]  %s365, 256, %s363, %s350, 128, 128, 8
        $region32: #{tpu_custom_call.1} parent=23 // pred_fallthru
          _
      $region24: #{tpu_custom_call.1} parent=5 // pred_fallthru
        _
      %p371 = scmp.le.s32.totalorder 2, %s13
      // Predicated region
      $region33: #{tpu_custom_call.1} parent=5 // pred_check
        %p372 = pneg %p371
      $region34: #{tpu_custom_call.1} parent=5 // pred_check_branch
        %374 = sbr.rel (%p372) target = $region36
      $region35: #{tpu_custom_call.1} parent=5 // pred_region
        %s375 = ssub.s32 %s13, 2
        // Predicated region
        $region37: #{tpu_custom_call.1} parent=35 // pred_check
          %p376 = pneg %p84
        $region38: #{tpu_custom_call.1} parent=35 // pred_check_branch
          %378 = sbr.rel (%p376) target = $region40
        $region39: #{tpu_custom_call.1} parent=35 // pred_region
          %s379 = sand.u32 %s69, 1
          %s380 = scalar_lea.sflag [#allocation4], %s379
          %s381 = sand.u32 %s69, 1
          %s382 = smul.addr %s381, 16
          %s383 = scalar_lea.vmem [#allocation5], %s382
          %384 = dma.done %s380, 256
        $region40: #{tpu_custom_call.1} parent=35 // pred_fallthru
          _
      $region36: #{tpu_custom_call.1} parent=5 // pred_fallthru
        _
    $region6: #{tpu_custom_call.1} parent=1 // loop_footer
      %s17 = sadd.s32 1, %s13
    $region7: #{tpu_custom_call.1} parent=1 // loop_footer_branch
      %12 = sbr.rel target = $region3
    $region8: #{tpu_custom_call.1} parent=1 // loop_exit
      _
    %385 = vsyncpa [#allocation3], 1
    %s386 = scalar_lea.sflag [#allocation3], 1
    %387 = vsyncpa %s386, 1
    %388 = vsyncpa [#allocation4], 1
    %s389 = scalar_lea.sflag [#allocation4], 1
    %390 = vsyncpa %s389, 1

</llo_original>
